<compile_context>
chip_gen: v6e
topology: v6e:2x2x1
jax: 0.10.0
libtpu: 0.0.40
codegen_flags: <defaults>
</compile_context>

<pallas_src>
import functools

import jax
import jax.numpy as jnp
from jax.experimental import pallas as pl
from jax.experimental.pallas import tpu as pltpu


def _round_up(x, m):
    return ((x + m - 1) // m) * m


def _tpu_vmem_and_cores():
    """Best-effort hardware query: (VMEM capacity bytes, TensorCores/chip)."""
    vmem_capacity = 64 << 20          # conservative fallback (v7x per-TC)
    num_cores = 1
    try:
        info = pltpu.get_tpu_info()
        vmem_capacity = int(getattr(info, "vmem_capacity_bytes", vmem_capacity))
        for name in ("num_cores", "tensorcores_per_chip",
                     "num_tensorcores", "cores_per_chip"):
            if hasattr(info, name):
                num_cores = int(getattr(info, name))
                break
    except Exception:
        pass
    return vmem_capacity, num_cores


# ----------------------------------------------------------------------------
# One-time (weight-load-time) packing.  In a serving stack this runs once when
# the checkpoint is loaded, NOT per forward call.
# ----------------------------------------------------------------------------
def pack_glm_mlp_weights(w1, w2, *, tf=None):
    """Pack GLM MLP weights for the fused kernel.

    w1: [H, 2F] merged gate||up weight, w2: [F, H] down projection.
    Returns (w1_packed [H, 2*F_pad], w2_packed [F_pad, H], F, tf) where the
    ffn dim is zero-padded to a multiple of tf (benign: silu(0)*0 = 0 and the
    padded W2 rows are zero) and W1 is interleaved per tf-tile as
    [..., gate_j || up_j, ...] so each grid step streams one (H, 2*tf) operand.
    """
    H, two_f = w1.shape
    F = two_f // 2
    assert w1.shape == (H, 2 * F) and w2.shape == (F, H)

    if tf is None:
        vmem_capacity, _ = _tpu_vmem_and_cores()
        # 128 MiB chips (v5e/v6e) can afford tf=1024 double-buffered tiles;
        # v7x (64 MiB) stays at tf=512.
        tf = 1024 if vmem_capacity >= (100 << 20) else 512
    tf = _round_up(tf, 128)                       # lane-aligned ffn tile
    tf = min(tf, _round_up(F, 128))
    F_pad = _round_up(F, tf)
    n = F_pad // tf

    w_gate = w1[:, :F]
    w_up = w1[:, F:]
    pad_f = F_pad - F
    if pad_f:
        w_gate = jnp.pad(w_gate, ((0, 0), (0, pad_f)))
        w_up = jnp.pad(w_up, ((0, 0), (0, pad_f)))
        w2 = jnp.pad(w2, ((0, pad_f), (0, 0)))

    # Interleave gate/up per ffn tile: columns [j*2tf, (j+1)*2tf) = gate_j||up_j.
    w1_packed = jnp.concatenate(
        [w_gate.reshape(H, n, tf), w_up.reshape(H, n, tf)], axis=2
    ).reshape(H, 2 * F_pad)

    return w1_packed, w2, F, tf


# ----------------------------------------------------------------------------
# Kernel
# ----------------------------------------------------------------------------
def _glm_mlp_kernel(x_ref, w1_ref, w2_ref, o_ref, acc_ref, *, tf):
    """One (token-tile, ffn-tile) grid step of the fused GLM MLP.

    x_ref  : (tm, H)        token row tile
    w1_ref : (H, 2*tf)      packed gate_j || up_j weight tile
    w2_ref : (tf, H)        down-projection weight tile (row slice)
    o_ref  : (tm, H)        output row tile (written on last ffn step)
    acc_ref: (tm, H) f32    VMEM accumulator, resident across the ffn axis
    """
    j = pl.program_id(1)

    @pl.when(j == 0)
    def _init():
        acc_ref[...] = jnp.zeros_like(acc_ref)

    # dense_h_to_4h: one (tm, H) x (H, 2*tf) MXU dot, f32 accumulation.
    h = jnp.dot(x_ref[...], w1_ref[...], preferred_element_type=jnp.float32)
    gate = h[:, :tf]          # lane-aligned slice (tf is a multiple of 128)
    up = h[:, tf:]

    # SiluAndMul in f32 (sigmoid runs on the EUP slot).
    act = gate * jax.nn.sigmoid(gate) * up

    # dense_4h_to_h partial product, accumulated over the ffn axis.
    acc_ref[...] += jnp.dot(act.astype(w2_ref.dtype), w2_ref[...],
                            preferred_element_type=jnp.float32)

    @pl.when(j == pl.num_programs(1) - 1)
    def _finalize():
        o_ref[...] = acc_ref[...].astype(o_ref.dtype)


# ----------------------------------------------------------------------------
# Per-call wrapper (no weight manipulation here).
# ----------------------------------------------------------------------------
def glm_mlp(hidden_states, packed_weights, *, tm=256):
    """Fused ChatGLM MLP forward.

    hidden_states : [T, H]
    packed_weights: output of pack_glm_mlp_weights()
    returns       : [T, H]
    """
    w1_packed, w2_packed, F, tf = packed_weights
    T, H = hidden_states.shape
    F_pad = w2_packed.shape[0]
    assert w1_packed.shape == (H, 2 * F_pad) and w2_packed.shape == (F_pad, H)
    assert F_pad % tf == 0

    vmem_capacity, num_cores = _tpu_vmem_and_cores()

    # ---- token-tile sizing -------------------------------------------------
    # Full-vreg sublane packing: 8 rows for f32, 16 for bf16, 32 for 8-bit.
    row_align = max(8, 32 // hidden_states.dtype.itemsize)
    tm = _round_up(max(tm, row_align), row_align)
    tm = min(tm, _round_up(T, row_align))
    T_pad = _round_up(T, tm)
    # Dual-TensorCore chips (v7x): keep >=2 token tiles so both cores (and
    # both DMA engines) stream weights in the decode regime.
    if num_cores >= 2 and T_pad // tm < 2 and T >= 2 * row_align:
        tm = _round_up((T + 1) // 2, row_align)
        T_pad = _round_up(T, tm)

    x = hidden_states
    if T_pad != T:
        x = jnp.pad(x, ((0, T_pad - T), (0, 0)))    # activations only (cheap)

    grid = (T_pad // tm, F_pad // tf)
    n_token_tiles = grid[0]

    # ---- advisory cost hint (weights re-streamed once per token tile) -----
    it_x = hidden_states.dtype.itemsize
    it_w1 = w1_packed.dtype.itemsize
    it_w2 = w2_packed.dtype.itemsize
    flops = 6 * T_pad * H * F_pad                    # 2*T*H*2F + 2*T*F*H
    transcendentals = 2 * T_pad * F_pad              # sigmoid = exp + recip
    bytes_accessed = (T_pad * H * it_x               # activations in
                      + T_pad * H * it_x             # activations out
                      + n_token_tiles * (w1_packed.size * it_w1
                                         + w2_packed.size * it_w2))
    cost = pl.CostEstimate(flops=flops, transcendentals=transcendentals,
                           bytes_accessed=bytes_accessed)

    # ---- generation-aware VMEM budget --------------------------------------
    per_step_bytes = (tm * H * it_x                  # x tile
                      + H * 2 * tf * it_w1           # packed gate||up tile
                      + tf * H * it_w2               # w2 tile
                      + tm * H * it_x)               # out tile
    f32_resident = (tm * H * 4                       # accumulator
                    + 4 * tm * tf * 4)               # h / gate / up / act
    need = 2 * per_step_bytes + f32_resident + (8 << 20)   # + internal scratch
    vmem_limit = int(min(max(need, 16 << 20), int(0.85 * vmem_capacity)))

    kernel = functools.partial(_glm_mlp_kernel, tf=tf)

    out = pl.pallas_call(
        kernel,
        out_shape=jax.ShapeDtypeStruct((T_pad, H), hidden_states.dtype),
        grid_spec=pltpu.PrefetchScalarGridSpec(
            num_scalar_prefetch=0,
            grid=grid,
            in_specs=[
                pl.BlockSpec((tm, H), lambda i, j: (i, 0)),        # x rows
                pl.BlockSpec((H, 2 * tf), lambda i, j: (0, j)),    # gate||up
                pl.BlockSpec((tf, H), lambda i, j: (j, 0)),        # down proj
            ],
            out_specs=pl.BlockSpec((tm, H), lambda i, j: (i, 0)),
            scratch_shapes=[pltpu.VMEM((tm, H), jnp.float32)],
        ),
        compiler_params=pltpu.CompilerParams(
            dimension_semantics=("parallel", "arbitrary"),
            vmem_limit_bytes=vmem_limit),
        cost_estimate=cost,
    )(x, w1_packed, w2_packed)

    return out[:T] if T_pad != T else out


def glm_mlp_from_raw(hidden_states, w1, w2, *, tm=256, tf=None):
    """Convenience path (tests / eager use): packs weights per call.
    Production code should call pack_glm_mlp_weights() once at load time."""
    packed = pack_glm_mlp_weights(w1, w2, tf=tf)
    return glm_mlp(hidden_states, packed, tm=tm)


def glm_mlp_reference(x, w1, w2):
    """Pure-JAX reference of the PyTorch forward pass."""
    h = x @ w1
    ffn = w2.shape[0]
    gate, up = h[:, :ffn], h[:, ffn:]
    return (jax.nn.silu(gate) * up) @ w2


if __name__ == "__main__":
    def make_inputs(T, H, F, dtype):
        k_x, k_w1, k_w2 = jax.random.split(jax.random.PRNGKey(0), 3)
        x = jax.random.normal(k_x, (T, H), dtype=jnp.float32)
        w1 = jax.random.normal(k_w1, (H, 2 * F), dtype=jnp.float32) * 0.05
        w2 = jax.random.normal(k_w2, (F, H), dtype=jnp.float32) * 0.05
        return x.astype(dtype), w1.astype(dtype), w2.astype(dtype)

    # 1) small even case, f32: single ffn tile, single token tile,
    #    load-time weight packing reused across calls.
    T, H, F = 8, 32, 64
    x, w1, w2 = make_inputs(T, H, F, jnp.float32)
    packed = pack_glm_mlp_weights(w1, w2)
    out = jax.block_until_ready(glm_mlp(x, packed))
    ref = glm_mlp_reference(x, w1, w2)
    assert out.shape == (T, H)
    assert jnp.allclose(out, ref, atol=1e-3, rtol=1e-3), "f32 even-case mismatch"

    # 2) ragged token count + multiple ffn/token tiles (exercises T/F padding,
    #    ffn-axis accumulation and the pl.when finalize), f32.
    T, H, F = 13, 32, 256
    x, w1, w2 = make_inputs(T, H, F, jnp.float32)
    packed = pack_glm_mlp_weights(w1, w2, tf=128)
    out = jax.block_until_ready(glm_mlp(x, packed, tm=8))
    ref = glm_mlp_reference(x, w1, w2)
    assert out.shape == (T, H)
    assert jnp.allclose(out, ref, atol=1e-3, rtol=1e-3), "f32 ragged-case mismatch"

    # 3) same ragged case in bf16 (production dtype: full-rate MXU, 16-row
    #    tiles) via the convenience wrapper, checked against an f32 reference
    #    of the bf16-cast operands.
    xb, w1b, w2b = make_inputs(T, H, F, jnp.bfloat16)
    out_b = jax.block_until_ready(glm_mlp_from_raw(xb, w1b, w2b, tm=16, tf=128))
    ref_b = glm_mlp_reference(xb.astype(jnp.float32),
                              w1b.astype(jnp.float32),
                              w2b.astype(jnp.float32))
    assert out_b.shape == (T, H)
    assert jnp.allclose(out_b.astype(jnp.float32), ref_b,
                        atol=5e-3, rtol=5e-2), "bf16 case mismatch"

    print("KERNEL_OK")
</pallas_src>

<mosaic_0001>
module attributes {stable_mosaic.version = 11 : i64} {
  func.func @_glm_mlp_kernel(%arg0: i32, %arg1: i32, %arg2: memref<8x32xf32, #tpu.memory_space<vmem>>, %arg3: memref<32x256xf32, #tpu.memory_space<vmem>>, %arg4: memref<128x32xf32, #tpu.memory_space<vmem>>, %arg5: memref<8x32xf32, #tpu.memory_space<vmem>>, %arg6: memref<8x32xf32, #tpu.memory_space<vmem>>) attributes {dimension_semantics = [#tpu.dimension_semantics<parallel>, #tpu.dimension_semantics<arbitrary>], iteration_bounds = array<i64: 1, 1>, scalar_prefetch = 0 : i64, scratch_operands = 1 : i64, tpu.core_type = #tpu.core_type<tc>, window_params = [{transform_indices = @transform_0, window_bounds = array<i64: 8, 32>}, {transform_indices = @transform_1, window_bounds = array<i64: 32, 256>}, {transform_indices = @transform_2, window_bounds = array<i64: 128, 32>}, {transform_indices = @transform_3, window_bounds = array<i64: 8, 32>}]} {
    %c0_i32 = arith.constant 0 : i32
    %0 = arith.cmpi eq, %arg1, %c0_i32 : i32
    %1 = arith.extui %0 : i1 to i32
    %c0_i32_0 = arith.constant 0 : i32
    %2 = arith.cmpi ne, %1, %c0_i32_0 : i32
    scf.if %2 {
      %cst_14 = arith.constant 0.000000e+00 : f32
      %23 = vector.broadcast %cst_14 : f32 to vector<8x32xf32>
      %c0_15 = arith.constant 0 : index
      %c0_16 = arith.constant 0 : index
      %24 = vector.load %arg6[%c0_15, %c0_16] : memref<8x32xf32, #tpu.memory_space<vmem>>, vector<8x32xf32>
      tpu.vector_store %arg6[%c0_15, %c0_16], %23 {strides = array<i32>} : memref<8x32xf32, #tpu.memory_space<vmem>>, vector<8x32xf32>,
    } else {
    }
    %c0 = arith.constant 0 : index
    %c0_1 = arith.constant 0 : index
    %3 = vector.load %arg2[%c0, %c0_1] : memref<8x32xf32, #tpu.memory_space<vmem>>, vector<8x32xf32>
    %c0_2 = arith.constant 0 : index
    %c0_3 = arith.constant 0 : index
    %4 = vector.load %arg3[%c0_2, %c0_3] : memref<32x256xf32, #tpu.memory_space<vmem>>, vector<32x256xf32>
    %cst = arith.constant dense<0.000000e+00> : vector<8x256xf32>
    %5 = tpu.matmul %3, %4, %cst {dimension_numbers = #tpu.dot_dimension_numbers<[1], [0], [0], [1], [0, 0, 1, 1], [], []>} : vector<8x32xf32>, vector<32x256xf32>, vector<8x256xf32> -> vector<8x256xf32>
    %6 = vector.extract_strided_slice %5 {offsets = [0, 0], sizes = [8, 128], strides = [1, 1]} : vector<8x256xf32> to vector<8x128xf32>
    %7 = vector.extract_strided_slice %5 {offsets = [0, 128], sizes = [8, 128], strides = [1, 1]} : vector<8x256xf32> to vector<8x128xf32>
    %8 = arith.negf %6 : vector<8x128xf32>
    %9 = math.exp %8 : vector<8x128xf32>
    %cst_4 = arith.constant 1.000000e+00 : f32
    %10 = vector.broadcast %cst_4 : f32 to vector<8x128xf32>
    %11 = arith.addf %10, %9 : vector<8x128xf32>
    %12 = arith.divf %10, %11 : vector<8x128xf32>
    %13 = arith.mulf %6, %12 : vector<8x128xf32>
    %14 = arith.mulf %13, %7 : vector<8x128xf32>
    %c0_5 = arith.constant 0 : index
    %c0_6 = arith.constant 0 : index
    %15 = vector.load %arg6[%c0_5, %c0_6] : memref<8x32xf32, #tpu.memory_space<vmem>>, vector<8x32xf32>
    %c0_7 = arith.constant 0 : index
    %c0_8 = arith.constant 0 : index
    %16 = vector.load %arg4[%c0_7, %c0_8] : memref<128x32xf32, #tpu.memory_space<vmem>>, vector<128x32xf32>
    %cst_9 = arith.constant dense<0.000000e+00> : vector<8x32xf32>
    %17 = tpu.matmul %14, %16, %cst_9 {dimension_numbers = #tpu.dot_dimension_numbers<[1], [0], [0], [1], [0, 0, 1, 1], [], []>} : vector<8x128xf32>, vector<128x32xf32>, vector<8x32xf32> -> vector<8x32xf32>
    %18 = arith.addf %15, %17 : vector<8x32xf32>
    %c0_10 = arith.constant 0 : index
    %c0_11 = arith.constant 0 : index
    %19 = vector.load %arg6[%c0_10, %c0_11] : memref<8x32xf32, #tpu.memory_space<vmem>>, vector<8x32xf32>
    tpu.vector_store %arg6[%c0_10, %c0_11], %18 {strides = array<i32>} : memref<8x32xf32, #tpu.memory_space<vmem>>, vector<8x32xf32>,
    %c0_i32_12 = arith.constant 0 : i32
    %20 = arith.cmpi eq, %arg1, %c0_i32_12 : i32
    %21 = arith.extui %20 : i1 to i32
    %c0_i32_13 = arith.constant 0 : i32
    %22 = arith.cmpi ne, %21, %c0_i32_13 : i32
    scf.if %22 {
      %c0_14 = arith.constant 0 : index
      %c0_15 = arith.constant 0 : index
      %23 = vector.load %arg6[%c0_14, %c0_15] : memref<8x32xf32, #tpu.memory_space<vmem>>, vector<8x32xf32>
      %c0_16 = arith.constant 0 : index
      %c0_17 = arith.constant 0 : index
      %24 = vector.load %arg5[%c0_16, %c0_17] : memref<8x32xf32, #tpu.memory_space<vmem>>, vector<8x32xf32>
      tpu.vector_store %arg5[%c0_16, %c0_17], %23 {strides = array<i32>} : memref<8x32xf32, #tpu.memory_space<vmem>>, vector<8x32xf32>,
    } else {
    }
    return
  }
  func.func @transform_0(%arg0: i32, %arg1: i32) -> (i32, i32) {
    %c0_i32 = arith.constant 0 : i32
    %c0_i32_0 = arith.constant 0 : i32
    return %arg0, %c0_i32 : i32, i32
  }
  func.func @transform_1(%arg0: i32, %arg1: i32) -> (i32, i32) {
    %c0_i32 = arith.constant 0 : i32
    %c0_i32_0 = arith.constant 0 : i32
    return %c0_i32, %arg1 : i32, i32
  }
  func.func @transform_2(%arg0: i32, %arg1: i32) -> (i32, i32) {
    %c0_i32 = arith.constant 0 : i32
    %c0_i32_0 = arith.constant 0 : i32
    return %arg1, %c0_i32 : i32, i32
  }
  func.func @transform_3(%arg0: i32, %arg1: i32) -> (i32, i32) {
    %c0_i32 = arith.constant 0 : i32
    %c0_i32_0 = arith.constant 0 : i32
    return %arg0, %c0_i32 : i32, i32
  }
}

</mosaic_0001>

<llo_original>
// kernel: tpu_custom_call.1
$region0: #{tpu_custom_call.1}
  #allocation0 [shape = 'u32[]', space=smem, size = 0x4, offset = 0x4, fixed_abs, tag = 'smem constant byte address 0x4 - core index']
  #allocation1 [shape = 'u32[144,128]{1,0:T(1,128)}', space=vmem, size = 0x12000, scoped, tag = 'internal scratch']
  #allocation2 [shape = 'f32[8,32]{1,0:T(8,128)}', space=vmem, size = 0x1000, scoped, tag = 'scratch operand']
  %s0 = inlined_call_operand.vmem [shape: f32[8,32], index: 0, kind: input, shape index: {}]
  %s1 = inlined_call_operand.vmem [shape: f32[32,256], index: 1, kind: input, shape index: {}]
  %s2 = inlined_call_operand.vmem [shape: f32[128,32], index: 2, kind: input, shape index: {}]
  %s3 = inlined_call_operand.hbm [shape: f32[8,32], index: 3, kind: output, shape index: {}]
  %s4 = sld [smem:[#allocation0]]
  $region30: #{tpu_custom_call.1} parent=0
    _
  %s6 = ssub.s32 1, %s4
  %s7 = scalar_select 0, %s6, %s4
  $region1: #{tpu_custom_call.1} parent=0
    #allocation3 [shape = 'u8[4096]{0}', space=vmem, size = 0x1000, scoped, tag = 'output window, operand 0, single buffered']
    #allocation4 [shape = 's32[1]{0}', space=sflag, size = 0x4, scoped, tag = 'scoped memory for tpu_custom_call.1']
    %8 = vsyncpa [#allocation4], 0
    // Predicated region
    $region2: #{tpu_custom_call.1} parent=1 // pred_check
      _
    $region3: #{tpu_custom_call.1} parent=1 // pred_check_branch
      %10 = sbr.rel (0) target = $region5
    $region4: #{tpu_custom_call.1} parent=1 // pred_region
      _
    $region5: #{tpu_custom_call.1} parent=1 // pred_fallthru
      _
    // Predicated region
    $region6: #{tpu_custom_call.1} parent=1 // pred_check
      _
    $region7: #{tpu_custom_call.1} parent=1 // pred_check_branch
      %12 = sbr.rel (0) target = $region9
    $region8: #{tpu_custom_call.1} parent=1 // pred_region
      _
    $region9: #{tpu_custom_call.1} parent=1 // pred_fallthru
      _
    // Predicated region
    $region10: #{tpu_custom_call.1} parent=1 // pred_check
      _
    $region11: #{tpu_custom_call.1} parent=1 // pred_check_branch
      %14 = sbr.rel (0) target = $region13
    $region12: #{tpu_custom_call.1} parent=1 // pred_region
      _
    $region13: #{tpu_custom_call.1} parent=1 // pred_fallthru
      _
    %p15 = scmp.eq.s32.totalorder 0, 0
    // Predicated region
    $region14: #{tpu_custom_call.1} parent=1 // pred_check
      %p16 = pneg %p15
    $region15: #{tpu_custom_call.1} parent=1 // pred_check_branch
      %18 = sbr.rel (%p16) target = $region17
    $region16: #{tpu_custom_call.1} parent=1 // pred_region
      %vm19 = vcmask 261120
      %20 = vst.msk [vmem:[#allocation2] sm:$0xff] %vm19, 0.0
    $region17: #{tpu_custom_call.1} parent=1 // pred_fallthru
      _
    %v21 = vld [vmem:[%s0] sm:$0xff]
    %v22 = vld [vmem:[%s1] sm:$0xff]
    %v23 = vld [vmem:[%s1 + $0x8] sm:$0xff]
    %v24 = vld [vmem:[%s1 + $0x10] sm:$0xff]
    %v25 = vld [vmem:[%s1 + $0x18] sm:$0xff]
    %v26 = vld [vmem:[%s1 + $0x20] sm:$0xff]
    %v27 = vld [vmem:[%s1 + $0x28] sm:$0xff]
    %v28 = vld [vmem:[%s1 + $0x30] sm:$0xff]
    %v29 = vld [vmem:[%s1 + $0x38] sm:$0xff]
    %vm30 = vcmask 261120
    %v32 = vsel %vm30, %v21, 0
    %34 = vmatprep.subr.mxu0 0.0
    %35 = vmatpush1.msra.mxu0 0.0
    %36 = vmatprep.subr.mxu0 0.0
    %37 = vmatpush1.msra.mxu0 0.0
    %38 = vmatprep.subr.mxu0 0.0
    %39 = vmatpush1.msra.mxu0 0.0
    %40 = vmatprep.subr.mxu0 0.0
    %41 = vmatpush1.msra.mxu0 0.0
    %42 = vmatprep.subr.mxu0 0.0
    %43 = vmatpush1.msra.mxu0 0.0
    %44 = vmatprep.subr.mxu0 0.0
    %45 = vmatpush1.msra.mxu0 0.0
    %46 = vmatprep.subr.mxu0 0.0
    %47 = vmatpush1.msra.mxu0 0.0
    %48 = vmatprep.subr.mxu0 0.0
    %49 = vmatpush1.msra.mxu0 0.0
    %50 = vmatprep.subr.mxu0 0.0
    %51 = vmatpush1.msra.mxu0 0.0
    %52 = vmatprep.subr.mxu0 0.0
    %53 = vmatpush1.msra.mxu0 0.0
    %54 = vmatprep.subr.mxu0 0.0
    %55 = vmatpush1.msra.mxu0 0.0
    %56 = vmatprep.subr.mxu0 0.0
    %57 = vmatpush1.msra.mxu0 0.0
    %58 = vmatprep.subr.mxu0 %v29
    %59 = vmatpush1.msra.mxu0 %v28
    %60 = vmatprep.subr.mxu0 %v27
    %61 = vmatpush1.msra.mxu0 %v26
    %62 = vmatprep.subr.mxu0 %v25
    %63 = vmatpush1.msra.mxu0 %v24
    %64 = vmatprep.subr.mxu0 %v23
    %65 = vmatpush1.msra.mxu0 %v22
    %66 = vmatprep.subr.mxu0 0.0
    %67 = vmatpush2.msra.mxu0 0.0
    %68 = vmatprep.subr.mxu0 0.0
    %69 = vmatpush2.msra.mxu0 0.0
    %70 = vmatprep.subr.mxu0 0.0
    %71 = vmatpush2.msra.mxu0 0.0
    %72 = vmatprep.subr.mxu0 0.0
    %73 = vmatpush2.msra.mxu0 0.0
    %74 = vmatprep.subr.mxu0 0.0
    %75 = vmatpush2.msra.mxu0 0.0
    %76 = vmatprep.subr.mxu0 0.0
    %77 = vmatpush2.msra.mxu0 0.0
    %78 = vmatprep.subr.mxu0 0.0
    %79 = vmatpush2.msra.mxu0 0.0
    %80 = vmatprep.subr.mxu0 0.0
    %81 = vmatpush2.msra.mxu0 0.0
    %82 = vmatprep.subr.mxu0 0.0
    %83 = vmatpush2.msra.mxu0 0.0
    %84 = vmatprep.subr.mxu0 0.0
    %85 = vmatpush2.msra.mxu0 0.0
    %86 = vmatprep.subr.mxu0 0.0
    %87 = vmatpush2.msra.mxu0 0.0
    %88 = vmatprep.subr.mxu0 0.0
    %89 = vmatpush2.msra.mxu0 0.0
    %90 = vmatprep.subr.mxu0 0.0
    %91 = vmatpush2.msra.mxu0 0.0
    %92 = vmatprep.subr.mxu0 0.0
    %93 = vmatpush2.msra.mxu0 0.0
    %94 = vmatprep.subr.mxu0 0.0
    %95 = vmatpush2.msra.mxu0 0.0
    %96 = vmatprep.subr.mxu0 0.0
    %97 = vmatpush2.msra.mxu0 0.0
    %98 = vmatprep.mubr.f32.mxu0 0.0
    %99 = vmatmul.mubr.f32.gmra.mxu0 %v32
    %v100 = vpop.f32.mrf.mxu0
    %v101 = vadd.f32 0.0, %v100
    %v102 = vpop.f32.mrf.mxu0
    %v103 = vadd.f32 0.0, %v102
    %104 = vdwg.mxu0
    %v105 = vxor.u32 %v101, 2147483648
    %v106 = vmul.f32 %v105, 1.442695
    %v107 = vpow.pop %v106
    %v108 = vadd.f32 %v107, 1.0
    %v109 = vrcp.pop %v108
    %v110 = vmul.f32 1.0, %v109
    %v111 = vmul.f32 %v101, %v110
    %v112 = vmul.f32 %v111, %v103
    %v113 = vld [vmem:[#allocation2] sm:$0xff]
    %v114 = vld [vmem:[%s2] sm:$0xff]
    %v115 = vld [vmem:[%s2 + $0x8] sm:$0xff]
    %v116 = vld [vmem:[%s2 + $0x10] sm:$0xff]
    %v117 = vld [vmem:[%s2 + $0x18] sm:$0xff]
    %v118 = vld [vmem:[%s2 + $0x20] sm:$0xff]
    %v119 = vld [vmem:[%s2 + $0x28] sm:$0xff]
    %v120 = vld [vmem:[%s2 + $0x30] sm:$0xff]
    %v121 = vld [vmem:[%s2 + $0x38] sm:$0xff]
    %v122 = vld [vmem:[%s2 + $0x40] sm:$0xff]
    %v123 = vld [vmem:[%s2 + $0x48] sm:$0xff]
    %v124 = vld [vmem:[%s2 + $0x50] sm:$0xff]
    %v125 = vld [vmem:[%s2 + $0x58] sm:$0xff]
    %v126 = vld [vmem:[%s2 + $0x60] sm:$0xff]
    %v127 = vld [vmem:[%s2 + $0x68] sm:$0xff]
    %v128 = vld [vmem:[%s2 + $0x70] sm:$0xff]
    %v129 = vld [vmem:[%s2 + $0x78] sm:$0xff]
    %130 = vmatprep.subr.mxu0 0.0
    %131 = vmatpush1.msra.mxu0 %v129
    %132 = vmatprep.subr.mxu0 0.0
    %133 = vmatpush1.msra.mxu0 %v128
    %134 = vmatprep.subr.mxu0 0.0
    %135 = vmatpush1.msra.mxu0 %v127
    %136 = vmatprep.subr.mxu0 0.0
    %137 = vmatpush1.msra.mxu0 %v126
    %138 = vmatprep.subr.mxu0 0.0
    %139 = vmatpush1.msra.mxu0 %v125
    %140 = vmatprep.subr.mxu0 0.0
    %141 = vmatpush1.msra.mxu0 %v124
    %142 = vmatprep.subr.mxu0 0.0
    %143 = vmatpush1.msra.mxu0 %v123
    %144 = vmatprep.subr.mxu0 0.0
    %145 = vmatpush1.msra.mxu0 %v122
    %146 = vmatprep.subr.mxu0 0.0
    %147 = vmatpush1.msra.mxu0 %v121
    %148 = vmatprep.subr.mxu0 0.0
    %149 = vmatpush1.msra.mxu0 %v120
    %150 = vmatprep.subr.mxu0 0.0
    %151 = vmatpush1.msra.mxu0 %v119
    %152 = vmatprep.subr.mxu0 0.0
    %153 = vmatpush1.msra.mxu0 %v118
    %154 = vmatprep.subr.mxu0 0.0
    %155 = vmatpush1.msra.mxu0 %v117
    %156 = vmatprep.subr.mxu0 0.0
    %157 = vmatpush1.msra.mxu0 %v116
    %158 = vmatprep.subr.mxu0 0.0
    %159 = vmatpush1.msra.mxu0 %v115
    %160 = vmatprep.subr.mxu0 0.0
    %161 = vmatpush1.msra.mxu0 %v114
    %162 = vmatprep.subr.mxu0 0.0
    %163 = vmatpush2.msra.mxu0 0.0
    %164 = vmatprep.subr.mxu0 0.0
    %165 = vmatpush2.msra.mxu0 0.0
    %166 = vmatprep.subr.mxu0 0.0
    %167 = vmatpush2.msra.mxu0 0.0
    %168 = vmatprep.subr.mxu0 0.0
    %169 = vmatpush2.msra.mxu0 0.0
    %170 = vmatprep.subr.mxu0 0.0
    %171 = vmatpush2.msra.mxu0 0.0
    %172 = vmatprep.subr.mxu0 0.0
    %173 = vmatpush2.msra.mxu0 0.0
    %174 = vmatprep.subr.mxu0 0.0
    %175 = vmatpush2.msra.mxu0 0.0
    %176 = vmatprep.subr.mxu0 0.0
    %177 = vmatpush2.msra.mxu0 0.0
    %178 = vmatprep.subr.mxu0 0.0
    %179 = vmatpush2.msra.mxu0 0.0
    %180 = vmatprep.subr.mxu0 0.0
    %181 = vmatpush2.msra.mxu0 0.0
    %182 = vmatprep.subr.mxu0 0.0
    %183 = vmatpush2.msra.mxu0 0.0
    %184 = vmatprep.subr.mxu0 0.0
    %185 = vmatpush2.msra.mxu0 0.0
    %186 = vmatprep.subr.mxu0 0.0
    %187 = vmatpush2.msra.mxu0 0.0
    %188 = vmatprep.subr.mxu0 0.0
    %189 = vmatpush2.msra.mxu0 0.0
    %190 = vmatprep.subr.mxu0 0.0
    %191 = vmatpush2.msra.mxu0 0.0
    %192 = vmatprep.subr.mxu0 0.0
    %193 = vmatpush2.msra.mxu0 0.0
    %194 = vmatprep.mubr.f32.mxu0 0.0
    %195 = vmatmul.mubr.f32.gmra.mxu0 %v112
    %v196 = vpop.f32.mrf.mxu0
    %v197 = vadd.f32 0.0, %v196
    %v198 = vpop.f32.mrf.mxu0
    %199 = vdwg.mxu0
    %v200 = vadd.f32 %v113, %v197
    %201 = vst.msk [vmem:[#allocation2] sm:$0xff] %vm30, %v200
    // Predicated region
    $region18: #{tpu_custom_call.1} parent=1 // pred_check
      %p202 = pneg %p15
    $region19: #{tpu_custom_call.1} parent=1 // pred_check_branch
      %204 = sbr.rel (%p202) target = $region21
    $region20: #{tpu_custom_call.1} parent=1 // pred_region
      %v205 = vld [vmem:[#allocation2] sm:$0xff]
      %206 = vst.msk [vmem:[#allocation3] sm:$0xff] %vm30, %v205
    $region21: #{tpu_custom_call.1} parent=1 // pred_fallthru
      _
    // Predicated region
    $region22: #{tpu_custom_call.1} parent=1 // pred_check
      _
    $region23: #{tpu_custom_call.1} parent=1 // pred_check_branch
      %208 = sbr.rel (0) target = $region25
    $region24: #{tpu_custom_call.1} parent=1 // pred_region
      %s210 = ssub.s32 128, 128
      %211 = vsyncadd [#allocation4], %s210
      %s213 = sshll.u32 [#allocation3], 4
      %s214 = int_to_ptr.vmem [resolvable:$true] %s213
      %216 = dma.vmem_to_hbm [thread:$0]  %s214, 128, %s3, [#allocation4]
    $region25: #{tpu_custom_call.1} parent=1 // pred_fallthru
      _
    // Predicated region
    $region26: #{tpu_custom_call.1} parent=1 // pred_check
      _
    $region27: #{tpu_custom_call.1} parent=1 // pred_check_branch
      %218 = sbr.rel (0) target = $region29
    $region28: #{tpu_custom_call.1} parent=1 // pred_region
      %219 = dma.done [#allocation4], 128
    $region29: #{tpu_custom_call.1} parent=1 // pred_fallthru
      _
    %220 = vsyncpa [#allocation4], 1

</llo_original>
